<compile_context>
chip_gen: v5e
topology: v5e:2x2
jax: 0.10.0
libtpu: 0.0.40
codegen_flags: <defaults>
</compile_context>

<pallas_src>
import math
import jax
import jax.numpy as jnp
from jax.experimental import pallas as pl
from jax.experimental.pallas import tpu as pltpu


def _round_up(x: int, m: int) -> int:
    return (x + m - 1) // m * m


def _value_head_kernel(x_ref, w1_ref, b1_ref, w2_ref, b2_ref, o_ref):
    # x_ref: (TILE_B, D) features in their native dtype; upcast on the VPU.
    x = x_ref[...].astype(jnp.float32)
    inv_d = 1.0 / x.shape[-1]

    # --- LayerNorm(d_model), eps = 1e-5, one-pass stats (clamped variance) ---
    mean = jnp.sum(x, axis=-1, keepdims=True) * inv_d            # E[x]
    meansq = jnp.sum(x * x, axis=-1, keepdims=True) * inv_d      # E[x^2]
    var = jnp.maximum(meansq - mean * mean, 0.0)                 # no NaN from cancellation
    xn = (x - mean) * jax.lax.rsqrt(var + 1e-5)                  # affine folded into w1/b1

    # --- Linear(d_model -> d_model//2); LN gamma/beta already folded in ---
    h = jnp.dot(xn, w1_ref[...], preferred_element_type=jnp.float32) + b1_ref[...]

    # --- GELU (exact / erf form, matching nn.GELU(approximate='none')) ---
    h = 0.5 * h * (1.0 + jax.lax.erf(h * (1.0 / math.sqrt(2.0))))

    # --- Linear(d_model//2 -> 1): plain MXU matvec, tiny (TILE_B, 1) store ---
    v = jnp.dot(h, w2_ref[...], preferred_element_type=jnp.float32) + b2_ref[...]
    o_ref[...] = v.astype(o_ref.dtype)


def value_head_pallas(features, gamma, beta, w1, b1, w2, b2, *, tile_b=4096):
    """features: (B, d_model) -> value: (B, 1) float32.

    w1: (D, H), b1: (H,), w2: (H,) (second linear weight row), b2: (1,).
    """
    B, D = features.shape
    H = w1.shape[1]
    Hp = _round_up(H, 128)                 # lane-dense hidden width

    # Fold LayerNorm affine into the first linear (saves VPU ops + 2 operands).
    gamma32 = gamma.astype(jnp.float32)
    beta32 = beta.astype(jnp.float32)
    w1_32 = w1.astype(jnp.float32)
    w1f = w1_32 * gamma32[:, None]                       # (D, H)
    b1f = b1.astype(jnp.float32) + beta32 @ w1_32        # (H,)

    # Zero-pad hidden dim of the value-head weights to Hp (padding contributes 0).
    w1_p = jnp.zeros((D, Hp), jnp.float32).at[:, :H].set(w1f)
    b1_p = jnp.zeros((1, Hp), jnp.float32).at[:, :H].set(b1f.reshape(1, H))
    w2_p = jnp.zeros((Hp, 1), jnp.float32).at[:H, :].set(w2.reshape(H, 1).astype(jnp.float32))
    b2_p = b2.reshape(1, 1).astype(jnp.float32)

    # Pad batch only to the next multiple of 128, in the native dtype (no extra
    # astype pass over HBM; the upcast happens in-kernel on the VPU).
    B_pad = _round_up(B, 128)
    x = features if B_pad == B else jnp.pad(features, ((0, B_pad - B), (0, 0)))

    # Tile selection: as large as requested, but (a) an exact divisor of B_pad so
    # no second padding pass is needed, and (b) >=2 grid steps when possible so
    # the "parallel" grid axis can shard across both TensorCores on v7x.
    units = B_pad // 128
    want = max(1, tile_b // 128)
    if units >= 2:
        want = min(want, max(1, units // 2))
    else:
        want = 1
    tb_units = next(u for u in range(min(want, units), 0, -1) if units % u == 0)
    tb = tb_units * 128
    num_blocks = units // tb_units

    # Rough VMEM budget; raise the scoped limit only when the default would bind.
    in_bytes = jnp.dtype(features.dtype).itemsize
    est = (2 * tb * D * in_bytes            # double-buffered feature blocks
           + tb * (3 * D + 2 * Hp) * 4      # f32 temporaries (x, xn, h, gelu)
           + D * Hp * 4 + 4 * Hp * 4        # resident weights / biases
           + 2 * tb * 4)                    # double-buffered output
    est = int(est * 1.3)
    cp_kwargs = dict(dimension_semantics=("parallel",))
    if est > (30 << 20):
        cp_kwargs["vmem_limit_bytes"] = min(est, 60 << 20)   # stay safe on v7x (64 MiB)

    const = lambda i: (0, 0)   # weights: same block every step -> stay VMEM resident

    out = pl.pallas_call(
        _value_head_kernel,
        out_shape=jax.ShapeDtypeStruct((B_pad, 1), jnp.float32),
        grid=(num_blocks,),
        in_specs=[
            pl.BlockSpec((tb, D), lambda i: (i, 0)),   # features: pipelined per step
            pl.BlockSpec((D, Hp), const),               # w1 (LN-affine folded)
            pl.BlockSpec((1, Hp), const),               # b1
            pl.BlockSpec((Hp, 1), const),               # w2 column
            pl.BlockSpec((1, 1), const),                # b2
        ],
        out_specs=pl.BlockSpec((tb, 1), lambda i: (i, 0)),
        compiler_params=pltpu.CompilerParams(**cp_kwargs),
    )(x, w1_p, b1_p, w2_p, b2_p)
    return out[:B]


def _reference(features, gamma, beta, w1, b1, w2, b2):
    x = features.astype(jnp.float32)
    mean = jnp.mean(x, axis=-1, keepdims=True)
    var = jnp.mean((x - mean) ** 2, axis=-1, keepdims=True)
    y = (x - mean) / jnp.sqrt(var + 1e-5) * gamma + beta
    h = y @ w1 + b1
    h = 0.5 * h * (1.0 + jax.lax.erf(h / jnp.sqrt(2.0)))
    return h @ w2.reshape(-1, 1) + b2


if __name__ == "__main__":
    B = 8          # batch
    D = 128        # d_model of the backbone
    H = D // 2     # hidden width of the value head

    key = jax.random.PRNGKey(0)
    k_feat, k_w1, k_b1, k_w2, k_b2 = jax.random.split(key, 5)

    # Synthetic "captured_features" (what the forward hook on mask_head would grab).
    features = jax.random.normal(k_feat, (B, D), dtype=jnp.float32)

    # Deterministic value_head parameters.
    gamma = jnp.ones((D,), dtype=jnp.float32) * 1.1       # LayerNorm weight
    beta = jnp.full((D,), 0.05, dtype=jnp.float32)        # LayerNorm bias
    w1 = jax.random.normal(k_w1, (D, H), dtype=jnp.float32) * (1.0 / math.sqrt(D))
    b1 = jax.random.normal(k_b1, (H,), dtype=jnp.float32) * 0.01
    w2 = jax.random.normal(k_w2, (H,), dtype=jnp.float32) * (1.0 / math.sqrt(H))
    b2 = jax.random.normal(k_b2, (1,), dtype=jnp.float32) * 0.01

    value = value_head_pallas(features, gamma, beta, w1, b1, w2, b2)
    value = jax.block_until_ready(value)

    ref = _reference(features, gamma, beta, w1, b1, w2, b2)
    assert value.shape == (B, 1)
    # Full-f32 matmuls -> tight tolerance vs the pure-f32 reference.
    assert jnp.allclose(value, ref, atol=1e-3, rtol=1e-3), "mismatch vs reference"

    print("KERNEL_OK")
</pallas_src>

<mosaic_0001>
module attributes {stable_mosaic.version = 11 : i64} {
  func.func @_value_head_kernel(%arg0: i32, %arg1: memref<128x128xf32, #tpu.memory_space<vmem>>, %arg2: memref<128x128xf32, #tpu.memory_space<vmem>>, %arg3: memref<1x128xf32, #tpu.memory_space<vmem>>, %arg4: memref<128x1xf32, #tpu.memory_space<vmem>>, %arg5: memref<1x1xf32, #tpu.memory_space<vmem>>, %arg6: memref<128x1xf32, #tpu.memory_space<vmem>>) attributes {dimension_semantics = [#tpu.dimension_semantics<parallel>], iteration_bounds = array<i64: 1>, scalar_prefetch = 0 : i64, scratch_operands = 0 : i64, tpu.core_type = #tpu.core_type<tc>, window_params = [{transform_indices = @transform_0, window_bounds = array<i64: 128, 128>}, {pipeline_mode = #tpu.pipeline_mode<synchronous>, transform_indices = @transform_1, window_bounds = array<i64: 128, 128>}, {pipeline_mode = #tpu.pipeline_mode<synchronous>, transform_indices = @transform_2, window_bounds = array<i64: 1, 128>}, {pipeline_mode = #tpu.pipeline_mode<synchronous>, transform_indices = @transform_3, window_bounds = array<i64: 128, 1>}, {pipeline_mode = #tpu.pipeline_mode<synchronous>, transform_indices = @transform_4, window_bounds = array<i64: 1, 1>}, {transform_indices = @transform_5, window_bounds = array<i64: 128, 1>}]} {
    %c0 = arith.constant 0 : index
    %c0_0 = arith.constant 0 : index
    %0 = vector.load %arg1[%c0, %c0_0] : memref<128x128xf32, #tpu.memory_space<vmem>>, vector<128x128xf32>
    %cst = arith.constant dense<0.000000e+00> : vector<128xf32>
    %1 = vector.multi_reduction <add>, %0, %cst [1] : vector<128x128xf32> to vector<128xf32>
    %2 = vector.shape_cast %1 : vector<128xf32> to vector<128x1xf32>
    %cst_1 = arith.constant 7.812500e-03 : f32
    %3 = vector.broadcast %cst_1 : f32 to vector<128x1xf32>
    %4 = arith.mulf %2, %3 : vector<128x1xf32>
    %5 = arith.mulf %0, %0 : vector<128x128xf32>
    %cst_2 = arith.constant dense<0.000000e+00> : vector<128xf32>
    %6 = vector.multi_reduction <add>, %5, %cst_2 [1] : vector<128x128xf32> to vector<128xf32>
    %7 = vector.shape_cast %6 : vector<128xf32> to vector<128x1xf32>
    %cst_3 = arith.constant 7.812500e-03 : f32
    %8 = vector.broadcast %cst_3 : f32 to vector<128x1xf32>
    %9 = arith.mulf %7, %8 : vector<128x1xf32>
    %10 = arith.mulf %4, %4 : vector<128x1xf32>
    %11 = arith.subf %9, %10 : vector<128x1xf32>
    %cst_4 = arith.constant 0.000000e+00 : f32
    %12 = vector.broadcast %cst_4 : f32 to vector<128x1xf32>
    %13 = arith.maximumf %11, %12 : vector<128x1xf32>
    %14 = vector.broadcast %4 : vector<128x1xf32> to vector<128x128xf32>
    %15 = arith.subf %0, %14 : vector<128x128xf32>
    %cst_5 = arith.constant 9.99999974E-6 : f32
    %16 = vector.broadcast %cst_5 : f32 to vector<128x1xf32>
    %17 = arith.addf %13, %16 : vector<128x1xf32>
    %18 = math.rsqrt %17 : vector<128x1xf32>
    %19 = vector.broadcast %18 : vector<128x1xf32> to vector<128x128xf32>
    %20 = arith.mulf %15, %19 : vector<128x128xf32>
    %c0_6 = arith.constant 0 : index
    %c0_7 = arith.constant 0 : index
    %21 = vector.load %arg2[%c0_6, %c0_7] : memref<128x128xf32, #tpu.memory_space<vmem>>, vector<128x128xf32>
    %cst_8 = arith.constant dense<0.000000e+00> : vector<128x128xf32>
    %22 = tpu.matmul %20, %21, %cst_8 {dimension_numbers = #tpu.dot_dimension_numbers<[1], [0], [0], [1], [0, 0, 1, 1], [], []>} : vector<128x128xf32>, vector<128x128xf32>, vector<128x128xf32> -> vector<128x128xf32>
    %c0_9 = arith.constant 0 : index
    %c0_10 = arith.constant 0 : index
    %23 = vector.load %arg3[%c0_9, %c0_10] : memref<1x128xf32, #tpu.memory_space<vmem>>, vector<1x128xf32>
    %24 = vector.broadcast %23 : vector<1x128xf32> to vector<128x128xf32>
    %25 = arith.addf %22, %24 : vector<128x128xf32>
    %cst_11 = arith.constant 5.000000e-01 : f32
    %26 = vector.broadcast %cst_11 : f32 to vector<128x128xf32>
    %27 = arith.mulf %26, %25 : vector<128x128xf32>
    %cst_12 = arith.constant 0.707106769 : f32
    %28 = vector.broadcast %cst_12 : f32 to vector<128x128xf32>
    %29 = arith.mulf %25, %28 : vector<128x128xf32>
    %30 = math.erf %29 : vector<128x128xf32>
    %cst_13 = arith.constant 1.000000e+00 : f32
    %31 = vector.broadcast %cst_13 : f32 to vector<128x128xf32>
    %32 = arith.addf %31, %30 : vector<128x128xf32>
    %33 = arith.mulf %27, %32 : vector<128x128xf32>
    %c0_14 = arith.constant 0 : index
    %c0_15 = arith.constant 0 : index
    %34 = vector.load %arg4[%c0_14, %c0_15] : memref<128x1xf32, #tpu.memory_space<vmem>>, vector<128x1xf32>
    %cst_16 = arith.constant dense<0.000000e+00> : vector<128x1xf32>
    %35 = tpu.matmul %33, %34, %cst_16 {dimension_numbers = #tpu.dot_dimension_numbers<[1], [0], [0], [1], [0, 0, 1, 1], [], []>} : vector<128x128xf32>, vector<128x1xf32>, vector<128x1xf32> -> vector<128x1xf32>
    %c0_17 = arith.constant 0 : index
    %c0_18 = arith.constant 0 : index
    %36 = vector.load %arg5[%c0_17, %c0_18] : memref<1x1xf32, #tpu.memory_space<vmem>>, vector<1x1xf32>
    %37 = vector.broadcast %36 : vector<1x1xf32> to vector<128x1xf32>
    %38 = arith.addf %35, %37 : vector<128x1xf32>
    %c0_19 = arith.constant 0 : index
    %c0_20 = arith.constant 0 : index
    %39 = vector.load %arg6[%c0_19, %c0_20] : memref<128x1xf32, #tpu.memory_space<vmem>>, vector<128x1xf32>
    tpu.vector_store %arg6[%c0_19, %c0_20], %38 {strides = array<i32>} : memref<128x1xf32, #tpu.memory_space<vmem>>, vector<128x1xf32>,
    return
  }
  func.func @transform_0(%arg0: i32) -> (i32, i32) {
    %c0_i32 = arith.constant 0 : i32
    %c0_i32_0 = arith.constant 0 : i32
    return %arg0, %c0_i32 : i32, i32
  }
  func.func @transform_1(%arg0: i32) -> (i32, i32) {
    %c0_i32 = arith.constant 0 : i32
    %c0_i32_0 = arith.constant 0 : i32
    %c0_i32_1 = arith.constant 0 : i32
    return %c0_i32, %c0_i32_0 : i32, i32
  }
  func.func @transform_2(%arg0: i32) -> (i32, i32) {
    %c0_i32 = arith.constant 0 : i32
    %c0_i32_0 = arith.constant 0 : i32
    %c0_i32_1 = arith.constant 0 : i32
    return %c0_i32, %c0_i32_0 : i32, i32
  }
  func.func @transform_3(%arg0: i32) -> (i32, i32) {
    %c0_i32 = arith.constant 0 : i32
    %c0_i32_0 = arith.constant 0 : i32
    %c0_i32_1 = arith.constant 0 : i32
    return %c0_i32, %c0_i32_0 : i32, i32
  }
  func.func @transform_4(%arg0: i32) -> (i32, i32) {
    %c0_i32 = arith.constant 0 : i32
    %c0_i32_0 = arith.constant 0 : i32
    %c0_i32_1 = arith.constant 0 : i32
    return %c0_i32, %c0_i32_0 : i32, i32
  }
  func.func @transform_5(%arg0: i32) -> (i32, i32) {
    %c0_i32 = arith.constant 0 : i32
    %c0_i32_0 = arith.constant 0 : i32
    return %arg0, %c0_i32 : i32, i32
  }
}

</mosaic_0001>

<llo_original>
// kernel: tpu_custom_call.1
$region0: #{tpu_custom_call.1}
  #allocation0 [shape = 'u32[]', space=smem, size = 0x4, offset = 0x4, fixed_abs, tag = 'smem constant byte address 0x4 - core index']
  #allocation1 [shape = 'u32[72,128]{1,0:T(1,128)}', space=vmem, size = 0x9000, scoped, tag = 'internal scratch']
  #allocation2 [shape = 'f32[1,1]{1,0:T(1,128)S(1)}', space=vmem, size = 0x200, scoped, tag = 'scoped memory for tpu_custom_call.1']
  %s0 = inlined_call_operand.vmem [shape: f32[128,128], index: 0, kind: input, shape index: {}]
  %s1 = inlined_call_operand.hbm [shape: f32[128,128], index: 1, kind: input, shape index: {}]
  %s2 = inlined_call_operand.vmem [shape: f32[1,128], index: 2, kind: input, shape index: {}]
  %s3 = inlined_call_operand.vmem [shape: f32[128,1], index: 3, kind: input, shape index: {}]
  %s4 = inlined_call_operand.<no memory space> [shape: f32[1,1], index: 4, kind: input, shape index: {}]
  %s5 = inlined_call_operand.vmem [shape: f32[128,1], index: 5, kind: output, shape index: {}]
  %s6 = sld [smem:[#allocation0]]
  $region34: #{tpu_custom_call.1} parent=0
    _
  %s8 = ssub.s32 1, %s6
  %s9 = scalar_select 0, %s8, %s6
  %v10 = vstv %s4
  %11 = vst [vmem:[#allocation2] sm:$0x1] %v10
  $region1: #{tpu_custom_call.1} parent=0
    #allocation3 [shape = 'u8[65536]{0}', space=vmem, size = 0x10000, scoped, tag = 'input window, operand 1, single buffered']
    #allocation4 [shape = 's32[1]{0}', space=sflag, size = 0x4, scoped, tag = 'scoped memory for tpu_custom_call.1']
    %12 = vsyncpa [#allocation4], 0
    // Predicated region
    $region2: #{tpu_custom_call.1} parent=1 // pred_check
      _
    $region3: #{tpu_custom_call.1} parent=1 // pred_check_branch
      %14 = sbr.rel (0) target = $region5
    $region4: #{tpu_custom_call.1} parent=1 // pred_region
      _
    $region5: #{tpu_custom_call.1} parent=1 // pred_fallthru
      _
    // Predicated region
    $region6: #{tpu_custom_call.1} parent=1 // pred_check
      _
    $region7: #{tpu_custom_call.1} parent=1 // pred_check_branch
      %16 = sbr.rel (0) target = $region9
    $region8: #{tpu_custom_call.1} parent=1 // pred_region
      %18 = vsyncadd [#allocation4], 0
      %s19 = sshll.u32 %s1, 4
      %s20 = int_to_ptr.hbm [resolvable:$true] %s19
      %s21 = sshll.u32 [#allocation3], 4
      %s22 = int_to_ptr.vmem [resolvable:$true] %s21
      %27 = dma.hbm_to_vmem [thread:$0]  %s20, 2048, %s22, [#allocation4], 128, 128, 8
    $region9: #{tpu_custom_call.1} parent=1 // pred_fallthru
      _
    // Predicated region
    $region10: #{tpu_custom_call.1} parent=1 // pred_check
      _
    $region11: #{tpu_custom_call.1} parent=1 // pred_check_branch
      %29 = sbr.rel (0) target = $region13
    $region12: #{tpu_custom_call.1} parent=1 // pred_region
      _
    $region13: #{tpu_custom_call.1} parent=1 // pred_fallthru
      _
    // Predicated region
    $region14: #{tpu_custom_call.1} parent=1 // pred_check
      _
    $region15: #{tpu_custom_call.1} parent=1 // pred_check_branch
      %31 = sbr.rel (0) target = $region17
    $region16: #{tpu_custom_call.1} parent=1 // pred_region
      _
    $region17: #{tpu_custom_call.1} parent=1 // pred_fallthru
      _
    // Predicated region
    $region18: #{tpu_custom_call.1} parent=1 // pred_check
      _
    $region19: #{tpu_custom_call.1} parent=1 // pred_check_branch
      %33 = sbr.rel (0) target = $region21
    $region20: #{tpu_custom_call.1} parent=1 // pred_region
      _
    $region21: #{tpu_custom_call.1} parent=1 // pred_fallthru
      _
    // Predicated region
    $region22: #{tpu_custom_call.1} parent=1 // pred_check
      _
    $region23: #{tpu_custom_call.1} parent=1 // pred_check_branch
      %35 = sbr.rel (0) target = $region25
    $region24: #{tpu_custom_call.1} parent=1 // pred_region
      %37 = dma.done [#allocation4], 2048
    $region25: #{tpu_custom_call.1} parent=1 // pred_fallthru
      _
    %v38 = vld [vmem:[%s0] sm:$0xff]
    %v39 = vld [vmem:[%s0 + $0x8] sm:$0xff]
    %v40 = vld [vmem:[%s0 + $0x10] sm:$0xff]
    %v41 = vld [vmem:[%s0 + $0x18] sm:$0xff]
    %v42 = vld [vmem:[%s0 + $0x20] sm:$0xff]
    %v43 = vld [vmem:[%s0 + $0x28] sm:$0xff]
    %v44 = vld [vmem:[%s0 + $0x30] sm:$0xff]
    %v45 = vld [vmem:[%s0 + $0x38] sm:$0xff]
    %v46 = vld [vmem:[%s0 + $0x40] sm:$0xff]
    %v47 = vld [vmem:[%s0 + $0x48] sm:$0xff]
    %v48 = vld [vmem:[%s0 + $0x50] sm:$0xff]
    %v49 = vld [vmem:[%s0 + $0x58] sm:$0xff]
    %v50 = vld [vmem:[%s0 + $0x60] sm:$0xff]
    %v51 = vld [vmem:[%s0 + $0x68] sm:$0xff]
    %v52 = vld [vmem:[%s0 + $0x70] sm:$0xff]
    %v53 = vld [vmem:[%s0 + $0x78] sm:$0xff]
    %54 = vadd.xlane.f32.xlu0 %v38
    %v55 = vpop.xlane.xlu0 %54
    %56 = vadd.xlane.f32.xlu0 %v39
    %v57 = vpop.xlane.xlu0 %56
    %58 = vadd.xlane.f32.xlu0 %v40
    %v59 = vpop.xlane.xlu0 %58
    %60 = vadd.xlane.f32.xlu0 %v41
    %v61 = vpop.xlane.xlu0 %60
    %62 = vadd.xlane.f32.xlu0 %v42
    %v63 = vpop.xlane.xlu0 %62
    %64 = vadd.xlane.f32.xlu0 %v43
    %v65 = vpop.xlane.xlu0 %64
    %66 = vadd.xlane.f32.xlu0 %v44
    %v67 = vpop.xlane.xlu0 %66
    %68 = vadd.xlane.f32.xlu0 %v45
    %v69 = vpop.xlane.xlu0 %68
    %70 = vadd.xlane.f32.xlu0 %v46
    %v71 = vpop.xlane.xlu0 %70
    %72 = vadd.xlane.f32.xlu0 %v47
    %v73 = vpop.xlane.xlu0 %72
    %74 = vadd.xlane.f32.xlu0 %v48
    %v75 = vpop.xlane.xlu0 %74
    %76 = vadd.xlane.f32.xlu0 %v49
    %v77 = vpop.xlane.xlu0 %76
    %78 = vadd.xlane.f32.xlu0 %v50
    %v79 = vpop.xlane.xlu0 %78
    %80 = vadd.xlane.f32.xlu0 %v51
    %v81 = vpop.xlane.xlu0 %80
    %82 = vadd.xlane.f32.xlu0 %v52
    %v83 = vpop.xlane.xlu0 %82
    %84 = vadd.xlane.f32.xlu0 %v53
    %v85 = vpop.xlane.xlu0 %84
    %v86 = vmul.f32 %v55, 0.0078125
    %v87 = vmul.f32 %v57, 0.0078125
    %v88 = vmul.f32 %v59, 0.0078125
    %v89 = vmul.f32 %v61, 0.0078125
    %v90 = vmul.f32 %v63, 0.0078125
    %v91 = vmul.f32 %v65, 0.0078125
    %v92 = vmul.f32 %v67, 0.0078125
    %v93 = vmul.f32 %v69, 0.0078125
    %v94 = vmul.f32 %v71, 0.0078125
    %v95 = vmul.f32 %v73, 0.0078125
    %v96 = vmul.f32 %v75, 0.0078125
    %v97 = vmul.f32 %v77, 0.0078125
    %v98 = vmul.f32 %v79, 0.0078125
    %v99 = vmul.f32 %v81, 0.0078125
    %v100 = vmul.f32 %v83, 0.0078125
    %v101 = vmul.f32 %v85, 0.0078125
    %v102 = vmul.f32 %v38, %v38
    %v103 = vmul.f32 %v39, %v39
    %v104 = vmul.f32 %v40, %v40
    %v105 = vmul.f32 %v41, %v41
    %v106 = vmul.f32 %v42, %v42
    %v107 = vmul.f32 %v43, %v43
    %v108 = vmul.f32 %v44, %v44
    %v109 = vmul.f32 %v45, %v45
    %v110 = vmul.f32 %v46, %v46
    %v111 = vmul.f32 %v47, %v47
    %v112 = vmul.f32 %v48, %v48
    %v113 = vmul.f32 %v49, %v49
    %v114 = vmul.f32 %v50, %v50
    %v115 = vmul.f32 %v51, %v51
    %v116 = vmul.f32 %v52, %v52
    %v117 = vmul.f32 %v53, %v53
    %118 = vadd.xlane.f32.xlu0 %v102
    %v119 = vpop.xlane.xlu0 %118
    %120 = vadd.xlane.f32.xlu0 %v103
    %v121 = vpop.xlane.xlu0 %120
    %122 = vadd.xlane.f32.xlu0 %v104
    %v123 = vpop.xlane.xlu0 %122
    %124 = vadd.xlane.f32.xlu0 %v105
    %v125 = vpop.xlane.xlu0 %124
    %126 = vadd.xlane.f32.xlu0 %v106
    %v127 = vpop.xlane.xlu0 %126
    %128 = vadd.xlane.f32.xlu0 %v107
    %v129 = vpop.xlane.xlu0 %128
    %130 = vadd.xlane.f32.xlu0 %v108
    %v131 = vpop.xlane.xlu0 %130
    %132 = vadd.xlane.f32.xlu0 %v109
    %v133 = vpop.xlane.xlu0 %132
    %134 = vadd.xlane.f32.xlu0 %v110
    %v135 = vpop.xlane.xlu0 %134
    %136 = vadd.xlane.f32.xlu0 %v111
    %v137 = vpop.xlane.xlu0 %136
    %138 = vadd.xlane.f32.xlu0 %v112
    %v139 = vpop.xlane.xlu0 %138
    %140 = vadd.xlane.f32.xlu0 %v113
    %v141 = vpop.xlane.xlu0 %140
    %142 = vadd.xlane.f32.xlu0 %v114
    %v143 = vpop.xlane.xlu0 %142
    %144 = vadd.xlane.f32.xlu0 %v115
    %v145 = vpop.xlane.xlu0 %144
    %146 = vadd.xlane.f32.xlu0 %v116
    %v147 = vpop.xlane.xlu0 %146
    %148 = vadd.xlane.f32.xlu0 %v117
    %v149 = vpop.xlane.xlu0 %148
    %v150 = vmul.f32 %v119, 0.0078125
    %v151 = vmul.f32 %v121, 0.0078125
    %v152 = vmul.f32 %v123, 0.0078125
    %v153 = vmul.f32 %v125, 0.0078125
    %v154 = vmul.f32 %v127, 0.0078125
    %v155 = vmul.f32 %v129, 0.0078125
    %v156 = vmul.f32 %v131, 0.0078125
    %v157 = vmul.f32 %v133, 0.0078125
    %v158 = vmul.f32 %v135, 0.0078125
    %v159 = vmul.f32 %v137, 0.0078125
    %v160 = vmul.f32 %v139, 0.0078125
    %v161 = vmul.f32 %v141, 0.0078125
    %v162 = vmul.f32 %v143, 0.0078125
    %v163 = vmul.f32 %v145, 0.0078125
    %v164 = vmul.f32 %v147, 0.0078125
    %v165 = vmul.f32 %v149, 0.0078125
    %v166 = vmul.f32 %v86, %v86
    %v167 = vmul.f32 %v87, %v87
    %v168 = vmul.f32 %v88, %v88
    %v169 = vmul.f32 %v89, %v89
    %v170 = vmul.f32 %v90, %v90
    %v171 = vmul.f32 %v91, %v91
    %v172 = vmul.f32 %v92, %v92
    %v173 = vmul.f32 %v93, %v93
    %v174 = vmul.f32 %v94, %v94
    %v175 = vmul.f32 %v95, %v95
    %v176 = vmul.f32 %v96, %v96
    %v177 = vmul.f32 %v97, %v97
    %v178 = vmul.f32 %v98, %v98
    %v179 = vmul.f32 %v99, %v99
    %v180 = vmul.f32 %v100, %v100
    %v181 = vmul.f32 %v101, %v101
    %v182 = vsub.f32 %v150, %v166
    %v183 = vsub.f32 %v151, %v167
    %v184 = vsub.f32 %v152, %v168
    %v185 = vsub.f32 %v153, %v169
    %v186 = vsub.f32 %v154, %v170
    %v187 = vsub.f32 %v155, %v171
    %v188 = vsub.f32 %v156, %v172
    %v189 = vsub.f32 %v157, %v173
    %v190 = vsub.f32 %v158, %v174
    %v191 = vsub.f32 %v159, %v175
    %v192 = vsub.f32 %v160, %v176
    %v193 = vsub.f32 %v161, %v177
    %v194 = vsub.f32 %v162, %v178
    %v195 = vsub.f32 %v163, %v179
    %v196 = vsub.f32 %v164, %v180
    %v197 = vsub.f32 %v165, %v181
    %v198 = vmax.f32 %v182, 0.0
    %v199 = vmax.f32 %v183, 0.0
    %v200 = vmax.f32 %v184, 0.0
    %v201 = vmax.f32 %v185, 0.0
    %v202 = vmax.f32 %v186, 0.0
    %v203 = vmax.f32 %v187, 0.0
    %v204 = vmax.f32 %v188, 0.0
    %v205 = vmax.f32 %v189, 0.0
    %v206 = vmax.f32 %v190, 0.0
    %v207 = vmax.f32 %v191, 0.0
    %v208 = vmax.f32 %v192, 0.0
    %v209 = vmax.f32 %v193, 0.0
    %v210 = vmax.f32 %v194, 0.0
    %v211 = vmax.f32 %v195, 0.0
    %v212 = vmax.f32 %v196, 0.0
    %v213 = vmax.f32 %v197, 0.0
    %v214 = vsub.f32 %v38, %v86
    %v215 = vsub.f32 %v39, %v87
    %v216 = vsub.f32 %v40, %v88
    %v217 = vsub.f32 %v41, %v89
    %v218 = vsub.f32 %v42, %v90
    %v219 = vsub.f32 %v43, %v91
    %v220 = vsub.f32 %v44, %v92
    %v221 = vsub.f32 %v45, %v93
    %v222 = vsub.f32 %v46, %v94
    %v223 = vsub.f32 %v47, %v95
    %v224 = vsub.f32 %v48, %v96
    %v225 = vsub.f32 %v49, %v97
    %v226 = vsub.f32 %v50, %v98
    %v227 = vsub.f32 %v51, %v99
    %v228 = vsub.f32 %v52, %v100
    %v229 = vsub.f32 %v53, %v101
    %v230 = vadd.f32 %v198, 1e-05
    %v231 = vadd.f32 %v199, 1e-05
    %v232 = vadd.f32 %v200, 1e-05
    %v233 = vadd.f32 %v201, 1e-05
    %v234 = vadd.f32 %v202, 1e-05
    %v235 = vadd.f32 %v203, 1e-05
    %v236 = vadd.f32 %v204, 1e-05
    %v237 = vadd.f32 %v205, 1e-05
    %v238 = vadd.f32 %v206, 1e-05
    %v239 = vadd.f32 %v207, 1e-05
    %v240 = vadd.f32 %v208, 1e-05
    %v241 = vadd.f32 %v209, 1e-05
    %v242 = vadd.f32 %v210, 1e-05
    %v243 = vadd.f32 %v211, 1e-05
    %v244 = vadd.f32 %v212, 1e-05
    %v245 = vadd.f32 %v213, 1e-05
    %v246 = vrsqrt.pop %v230
    %v247 = vmul.f32 %v246, %v230
    %v248 = vmul.f32 %v247, %v246
    %v249 = vmul.f32 0.5, %v248
    %v250 = vsub.f32 1.5, %v249
    %v251 = vmul.f32 %v246, %v250
    %vm252 = vweird.f32 %v230
    %vm253 = vweird.f32 %v246
    %vm254 = vmor %vm252, %vm253
    %v255 = vsel %vm254, %v246, %v251
    %v256 = vrsqrt.pop %v231
    %v257 = vmul.f32 %v256, %v231
    %v258 = vmul.f32 %v257, %v256
    %v259 = vmul.f32 0.5, %v258
    %v260 = vsub.f32 1.5, %v259
    %v261 = vmul.f32 %v256, %v260
    %vm262 = vweird.f32 %v231
    %vm263 = vweird.f32 %v256
    %vm264 = vmor %vm262, %vm263
    %v265 = vsel %vm264, %v256, %v261
    %v266 = vrsqrt.pop %v232
    %v267 = vmul.f32 %v266, %v232
    %v268 = vmul.f32 %v267, %v266
    %v269 = vmul.f32 0.5, %v268
    %v270 = vsub.f32 1.5, %v269
    %v271 = vmul.f32 %v266, %v270
    %vm272 = vweird.f32 %v232
    %vm273 = vweird.f32 %v266
    %vm274 = vmor %vm272, %vm273
    %v275 = vsel %vm274, %v266, %v271
    %v276 = vrsqrt.pop %v233
    %v277 = vmul.f32 %v276, %v233
    %v278 = vmul.f32 %v277, %v276
    %v279 = vmul.f32 0.5, %v278
    %v280 = vsub.f32 1.5, %v279
    %v281 = vmul.f32 %v276, %v280
    %vm282 = vweird.f32 %v233
    %vm283 = vweird.f32 %v276
    %vm284 = vmor %vm282, %vm283
    %v285 = vsel %vm284, %v276, %v281
    %v286 = vrsqrt.pop %v234
    %v287 = vmul.f32 %v286, %v234
    %v288 = vmul.f32 %v287, %v286
    %v289 = vmul.f32 0.5, %v288
    %v290 = vsub.f32 1.5, %v289
    %v291 = vmul.f32 %v286, %v290
    %vm292 = vweird.f32 %v234
    %vm293 = vweird.f32 %v286
    %vm294 = vmor %vm292, %vm293
    %v295 = vsel %vm294, %v286, %v291
    %v296 = vrsqrt.pop %v235
    %v297 = vmul.f32 %v296, %v235
    %v298 = vmul.f32 %v297, %v296
    %v299 = vmul.f32 0.5, %v298
    %v300 = vsub.f32 1.5, %v299
    %v301 = vmul.f32 %v296, %v300
    %vm302 = vweird.f32 %v235
    %vm303 = vweird.f32 %v296
    %vm304 = vmor %vm302, %vm303
    %v305 = vsel %vm304, %v296, %v301
    %v306 = vrsqrt.pop %v236
    %v307 = vmul.f32 %v306, %v236
    %v308 = vmul.f32 %v307, %v306
    %v309 = vmul.f32 0.5, %v308
    %v310 = vsub.f32 1.5, %v309
    %v311 = vmul.f32 %v306, %v310
    %vm312 = vweird.f32 %v236
    %vm313 = vweird.f32 %v306
    %vm314 = vmor %vm312, %vm313
    %v315 = vsel %vm314, %v306, %v311
    %v316 = vrsqrt.pop %v237
    %v317 = vmul.f32 %v316, %v237
    %v318 = vmul.f32 %v317, %v316
    %v319 = vmul.f32 0.5, %v318
    %v320 = vsub.f32 1.5, %v319
    %v321 = vmul.f32 %v316, %v320
    %vm322 = vweird.f32 %v237
    %vm323 = vweird.f32 %v316
    %vm324 = vmor %vm322, %vm323
    %v325 = vsel %vm324, %v316, %v321
    %v326 = vrsqrt.pop %v238
    %v327 = vmul.f32 %v326, %v238
    %v328 = vmul.f32 %v327, %v326
    %v329 = vmul.f32 0.5, %v328
    %v330 = vsub.f32 1.5, %v329
    %v331 = vmul.f32 %v326, %v330
    %vm332 = vweird.f32 %v238
    %vm333 = vweird.f32 %v326
    %vm334 = vmor %vm332, %vm333
    %v335 = vsel %vm334, %v326, %v331
    %v336 = vrsqrt.pop %v239
    %v337 = vmul.f32 %v336, %v239
    %v338 = vmul.f32 %v337, %v336
    %v339 = vmul.f32 0.5, %v338
    %v340 = vsub.f32 1.5, %v339
    %v341 = vmul.f32 %v336, %v340
    %vm342 = vweird.f32 %v239
    %vm343 = vweird.f32 %v336
    %vm344 = vmor %vm342, %vm343
    %v345 = vsel %vm344, %v336, %v341
    %v346 = vrsqrt.pop %v240
    %v347 = vmul.f32 %v346, %v240
    %v348 = vmul.f32 %v347, %v346
    %v349 = vmul.f32 0.5, %v348
    %v350 = vsub.f32 1.5, %v349
    %v351 = vmul.f32 %v346, %v350
    %vm352 = vweird.f32 %v240
    %vm353 = vweird.f32 %v346
    %vm354 = vmor %vm352, %vm353
    %v355 = vsel %vm354, %v346, %v351
    %v356 = vrsqrt.pop %v241
    %v357 = vmul.f32 %v356, %v241
    %v358 = vmul.f32 %v357, %v356
    %v359 = vmul.f32 0.5, %v358
    %v360 = vsub.f32 1.5, %v359
    %v361 = vmul.f32 %v356, %v360
    %vm362 = vweird.f32 %v241
    %vm363 = vweird.f32 %v356
    %vm364 = vmor %vm362, %vm363
    %v365 = vsel %vm364, %v356, %v361
    %v366 = vrsqrt.pop %v242
    %v367 = vmul.f32 %v366, %v242
    %v368 = vmul.f32 %v367, %v366
    %v369 = vmul.f32 0.5, %v368
    %v370 = vsub.f32 1.5, %v369
    %v371 = vmul.f32 %v366, %v370
    %vm372 = vweird.f32 %v242
    %vm373 = vweird.f32 %v366
    %vm374 = vmor %vm372, %vm373
    %v375 = vsel %vm374, %v366, %v371
    %v376 = vrsqrt.pop %v243
    %v377 = vmul.f32 %v376, %v243
    %v378 = vmul.f32 %v377, %v376
    %v379 = vmul.f32 0.5, %v378
    %v380 = vsub.f32 1.5, %v379
    %v381 = vmul.f32 %v376, %v380
    %vm382 = vweird.f32 %v243
    %vm383 = vweird.f32 %v376
    %vm384 = vmor %vm382, %vm383
    %v385 = vsel %vm384, %v376, %v381
    %v386 = vrsqrt.pop %v244
    %v387 = vmul.f32 %v386, %v244
    %v388 = vmul.f32 %v387, %v386
    %v389 = vmul.f32 0.5, %v388
    %v390 = vsub.f32 1.5, %v389
    %v391 = vmul.f32 %v386, %v390
    %vm392 = vweird.f32 %v244
    %vm393 = vweird.f32 %v386
    %vm394 = vmor %vm392, %vm393
    %v395 = vsel %vm394, %v386, %v391
    %v396 = vrsqrt.pop %v245
    %v397 = vmul.f32 %v396, %v245
    %v398 = vmul.f32 %v397, %v396
    %v399 = vmul.f32 0.5, %v398
    %v400 = vsub.f32 1.5, %v399
    %v401 = vmul.f32 %v396, %v400
    %vm402 = vweird.f32 %v245
    %vm403 = vweird.f32 %v396
    %vm404 = vmor %vm402, %vm403
    %v405 = vsel %vm404, %v396, %v401
    %v406 = vmul.f32 %v214, %v255
    %v407 = vmul.f32 %v215, %v265
    %v408 = vmul.f32 %v216, %v275
    %v409 = vmul.f32 %v217, %v285
    %v410 = vmul.f32 %v218, %v295
    %v411 = vmul.f32 %v219, %v305
    %v412 = vmul.f32 %v220, %v315
    %v413 = vmul.f32 %v221, %v325
    %v414 = vmul.f32 %v222, %v335
    %v415 = vmul.f32 %v223, %v345
    %v416 = vmul.f32 %v224, %v355
    %v417 = vmul.f32 %v225, %v365
    %v418 = vmul.f32 %v226, %v375
    %v419 = vmul.f32 %v227, %v385
    %v420 = vmul.f32 %v228, %v395
    %v421 = vmul.f32 %v229, %v405
    %v422 = vld [vmem:[#allocation3] sm:$0xff]
    %v423 = vld [vmem:[#allocation3 + $0x8] sm:$0xff]
    %v424 = vld [vmem:[#allocation3 + $0x10] sm:$0xff]
    %v425 = vld [vmem:[#allocation3 + $0x18] sm:$0xff]
    %v426 = vld [vmem:[#allocation3 + $0x20] sm:$0xff]
    %v427 = vld [vmem:[#allocation3 + $0x28] sm:$0xff]
    %v428 = vld [vmem:[#allocation3 + $0x30] sm:$0xff]
    %v429 = vld [vmem:[#allocation3 + $0x38] sm:$0xff]
    %v430 = vld [vmem:[#allocation3 + $0x40] sm:$0xff]
    %v431 = vld [vmem:[#allocation3 + $0x48] sm:$0xff]
    %v432 = vld [vmem:[#allocation3 + $0x50] sm:$0xff]
    %v433 = vld [vmem:[#allocation3 + $0x58] sm:$0xff]
    %v434 = vld [vmem:[#allocation3 + $0x60] sm:$0xff]
    %v435 = vld [vmem:[#allocation3 + $0x68] sm:$0xff]
    %v436 = vld [vmem:[#allocation3 + $0x70] sm:$0xff]
    %v437 = vld [vmem:[#allocation3 + $0x78] sm:$0xff]
    %v438 = vld [vmem:[%s2] sm:$0x1]
    %v440 = vperm.slane %v438, 0
    %442 = vmatpush.msra.mxu0 %v437
    %443 = vmatpush.msra.mxu0 %v436
    %444 = vmatpush.msra.mxu0 %v435
    %445 = vmatpush.msra.mxu0 %v434
    %446 = vmatpush.msra.mxu0 %v433
    %447 = vmatpush.msra.mxu0 %v432
    %448 = vmatpush.msra.mxu0 %v431
    %449 = vmatpush.msra.mxu0 %v430
    %450 = vmatpush.msra.mxu0 %v429
    %451 = vmatpush.msra.mxu0 %v428
    %452 = vmatpush.msra.mxu0 %v427
    %453 = vmatpush.msra.mxu0 %v426
    %454 = vmatpush.msra.mxu0 %v425
    %455 = vmatpush.msra.mxu0 %v424
    %456 = vmatpush.msra.mxu0 %v423
    %457 = vmatpush.msra.mxu0 %v422
    %458 = vmatmul.f32.gmra.mxu0 %v406
    %v459 = vpop.f32.mrf.mxu0
    %v460 = vadd.f32 %v440, %v459
    %461 = vmatmul.f32.gmra.mxu0 %v407
    %v462 = vpop.f32.mrf.mxu0
    %v463 = vadd.f32 %v440, %v462
    %464 = vmatmul.f32.gmra.mxu0 %v408
    %v465 = vpop.f32.mrf.mxu0
    %v466 = vadd.f32 %v440, %v465
    %467 = vmatmul.f32.gmra.mxu0 %v409
    %v468 = vpop.f32.mrf.mxu0
    %v469 = vadd.f32 %v440, %v468
    %470 = vmatmul.f32.gmra.mxu0 %v410
    %v471 = vpop.f32.mrf.mxu0
    %v472 = vadd.f32 %v440, %v471
    %473 = vmatmul.f32.gmra.mxu0 %v411
    %v474 = vpop.f32.mrf.mxu0
    %v475 = vadd.f32 %v440, %v474
    %476 = vmatmul.f32.gmra.mxu0 %v412
    %v477 = vpop.f32.mrf.mxu0
    %v478 = vadd.f32 %v440, %v477
    %479 = vmatmul.f32.gmra.mxu0 %v413
    %v480 = vpop.f32.mrf.mxu0
    %v481 = vadd.f32 %v440, %v480
    %482 = vmatmul.f32.gmra.mxu0 %v414
    %v483 = vpop.f32.mrf.mxu0
    %v484 = vadd.f32 %v440, %v483
    %485 = vmatmul.f32.gmra.mxu0 %v415
    %v486 = vpop.f32.mrf.mxu0
    %v487 = vadd.f32 %v440, %v486
    %488 = vmatmul.f32.gmra.mxu0 %v416
    %v489 = vpop.f32.mrf.mxu0
    %v490 = vadd.f32 %v440, %v489
    %491 = vmatmul.f32.gmra.mxu0 %v417
    %v492 = vpop.f32.mrf.mxu0
    %v493 = vadd.f32 %v440, %v492
    %494 = vmatmul.f32.gmra.mxu0 %v418
    %v495 = vpop.f32.mrf.mxu0
    %v496 = vadd.f32 %v440, %v495
    %497 = vmatmul.f32.gmra.mxu0 %v419
    %v498 = vpop.f32.mrf.mxu0
    %v499 = vadd.f32 %v440, %v498
    %500 = vmatmul.f32.gmra.mxu0 %v420
    %v501 = vpop.f32.mrf.mxu0
    %v502 = vadd.f32 %v440, %v501
    %503 = vmatmul.f32.gmra.mxu0 %v421
    %v504 = vpop.f32.mrf.mxu0
    %v505 = vadd.f32 %v440, %v504
    %506 = vdwg.mxu0
    %v507 = vmul.f32 %v460, 0.5
    %v508 = vmul.f32 %v463, 0.5
    %v509 = vmul.f32 %v466, 0.5
    %v510 = vmul.f32 %v469, 0.5
    %v511 = vmul.f32 %v472, 0.5
    %v512 = vmul.f32 %v475, 0.5
    %v513 = vmul.f32 %v478, 0.5
    %v514 = vmul.f32 %v481, 0.5
    %v515 = vmul.f32 %v484, 0.5
    %v516 = vmul.f32 %v487, 0.5
    %v517 = vmul.f32 %v490, 0.5
    %v518 = vmul.f32 %v493, 0.5
    %v519 = vmul.f32 %v496, 0.5
    %v520 = vmul.f32 %v499, 0.5
    %v521 = vmul.f32 %v502, 0.5
    %v522 = vmul.f32 %v505, 0.5
    %v523 = vmul.f32 %v460, 0.70710677
    %v524 = vmul.f32 %v463, 0.70710677
    %v525 = vmul.f32 %v466, 0.70710677
    %v526 = vmul.f32 %v469, 0.70710677
    %v527 = vmul.f32 %v472, 0.70710677
    %v528 = vmul.f32 %v475, 0.70710677
    %v529 = vmul.f32 %v478, 0.70710677
    %v530 = vmul.f32 %v481, 0.70710677
    %v531 = vmul.f32 %v484, 0.70710677
    %v532 = vmul.f32 %v487, 0.70710677
    %v533 = vmul.f32 %v490, 0.70710677
    %v534 = vmul.f32 %v493, 0.70710677
    %v535 = vmul.f32 %v496, 0.70710677
    %v536 = vmul.f32 %v499, 0.70710677
    %v537 = vmul.f32 %v502, 0.70710677
    %v538 = vmul.f32 %v505, 0.70710677
    %v539 = vmul.f32 %v523, %v523
    %v540 = vmin.f32 16.0, %v539
    %v541 = vmul.f32 %v540, 2.1237322e-06
    %v542 = vadd.f32 %v541, 0.00028619796
    %v543 = vmul.f32 %v540, %v542
    %v544 = vadd.f32 %v543, 0.0036580483
    %v545 = vmul.f32 %v540, %v544
    %v546 = vadd.f32 %v545, 0.05243302
    %v547 = vmul.f32 %v540, %v546
    %v548 = vadd.f32 %v547, 0.18741608
    %v549 = vmul.f32 %v540, %v548
    %v550 = vadd.f32 %v549, 1.1283791
    %v551 = vmul.f32 %v523, %v550
    %v552 = vmul.f32 %v540, 3.8918573e-05
    %v553 = vadd.f32 %v552, 0.001143296
    %v554 = vmul.f32 %v540, %v553
    %v555 = vadd.f32 %v554, 0.014752088
    %v556 = vmul.f32 %v540, %v555
    %v557 = vadd.f32 %v556, 0.112945676
    %v558 = vmul.f32 %v540, %v557
    %v559 = vadd.f32 %v558, 0.4994258
    %v560 = vmul.f32 %v540, %v559
    %v561 = vadd.f32 %v560, 1.0
    %v562 = vrcp.pop %v561
    %v563 = vmul.f32 %v561, %v562
    %v564 = vsub.f32 1.0, %v563
    %v565 = vmul.f32 %v562, %v564
    %v566 = vadd.f32 %v562, %v565
    %vm567 = vweird.f32 %v561
    %vm568 = vweird.f32 %v562
    %vm569 = vmor %vm567, %vm568
    %v570 = vsel %vm569, %v562, %v566
    %v571 = vand.u32 2147483647, %v561
    %vm572 = vcmp.eq.f32.partialorder %v571, 8.507059e+37
    %v573 = vand.u32 %v561, 2147483648
    %v574 = vor.u32 1.1754944e-38, %v573
    %v575 = vsel %vm572, %v574, %v570
    %v576 = vmul.f32 %v551, %v575
    %v577 = vmin.f32 %v576, 1.0
    %v578 = vmax.f32 %v577, -1.0
    %v579 = vmul.f32 %v524, %v524
    %v580 = vmin.f32 16.0, %v579
    %v581 = vmul.f32 %v580, 2.1237322e-06
    %v582 = vadd.f32 %v581, 0.00028619796
    %v583 = vmul.f32 %v580, %v582
    %v584 = vadd.f32 %v583, 0.0036580483
    %v585 = vmul.f32 %v580, %v584
    %v586 = vadd.f32 %v585, 0.05243302
    %v587 = vmul.f32 %v580, %v586
    %v588 = vadd.f32 %v587, 0.18741608
    %v589 = vmul.f32 %v580, %v588
    %v590 = vadd.f32 %v589, 1.1283791
    %v591 = vmul.f32 %v524, %v590
    %v592 = vmul.f32 %v580, 3.8918573e-05
    %v593 = vadd.f32 %v592, 0.001143296
    %v594 = vmul.f32 %v580, %v593
    %v595 = vadd.f32 %v594, 0.014752088
    %v596 = vmul.f32 %v580, %v595
    %v597 = vadd.f32 %v596, 0.112945676
    %v598 = vmul.f32 %v580, %v597
    %v599 = vadd.f32 %v598, 0.4994258
    %v600 = vmul.f32 %v580, %v599
    %v601 = vadd.f32 %v600, 1.0
    %v602 = vrcp.pop %v601
    %v603 = vmul.f32 %v601, %v602
    %v604 = vsub.f32 1.0, %v603
    %v605 = vmul.f32 %v602, %v604
    %v606 = vadd.f32 %v602, %v605
    %vm607 = vweird.f32 %v601
    %vm608 = vweird.f32 %v602
    %vm609 = vmor %vm607, %vm608
    %v610 = vsel %vm609, %v602, %v606
    %v611 = vand.u32 2147483647, %v601
    %vm612 = vcmp.eq.f32.partialorder %v611, 8.507059e+37
    %v613 = vand.u32 %v601, 2147483648
    %v614 = vor.u32 1.1754944e-38, %v613
    %v615 = vsel %vm612, %v614, %v610
    %v616 = vmul.f32 %v591, %v615
    %v617 = vmin.f32 %v616, 1.0
    %v618 = vmax.f32 %v617, -1.0
    %v619 = vmul.f32 %v525, %v525
    %v620 = vmin.f32 16.0, %v619
    %v621 = vmul.f32 %v620, 2.1237322e-06
    %v622 = vadd.f32 %v621, 0.00028619796
    %v623 = vmul.f32 %v620, %v622
    %v624 = vadd.f32 %v623, 0.0036580483
    %v625 = vmul.f32 %v620, %v624
    %v626 = vadd.f32 %v625, 0.05243302
    %v627 = vmul.f32 %v620, %v626
    %v628 = vadd.f32 %v627, 0.18741608
    %v629 = vmul.f32 %v620, %v628
    %v630 = vadd.f32 %v629, 1.1283791
    %v631 = vmul.f32 %v525, %v630
    %v632 = vmul.f32 %v620, 3.8918573e-05
    %v633 = vadd.f32 %v632, 0.001143296
    %v634 = vmul.f32 %v620, %v633
    %v635 = vadd.f32 %v634, 0.014752088
    %v636 = vmul.f32 %v620, %v635
    %v637 = vadd.f32 %v636, 0.112945676
    %v638 = vmul.f32 %v620, %v637
    %v639 = vadd.f32 %v638, 0.4994258
    %v640 = vmul.f32 %v620, %v639
    %v641 = vadd.f32 %v640, 1.0
    %v642 = vrcp.pop %v641
    %v643 = vmul.f32 %v641, %v642
    %v644 = vsub.f32 1.0, %v643
    %v645 = vmul.f32 %v642, %v644
    %v646 = vadd.f32 %v642, %v645
    %vm647 = vweird.f32 %v641
    %vm648 = vweird.f32 %v642
    %vm649 = vmor %vm647, %vm648
    %v650 = vsel %vm649, %v642, %v646
    %v651 = vand.u32 2147483647, %v641
    %vm652 = vcmp.eq.f32.partialorder %v651, 8.507059e+37
    %v653 = vand.u32 %v641, 2147483648
    %v654 = vor.u32 1.1754944e-38, %v653
    %v655 = vsel %vm652, %v654, %v650
    %v656 = vmul.f32 %v631, %v655
    %v657 = vmin.f32 %v656, 1.0
    %v658 = vmax.f32 %v657, -1.0
    %v659 = vmul.f32 %v526, %v526
    %v660 = vmin.f32 16.0, %v659
    %v661 = vmul.f32 %v660, 2.1237322e-06
    %v662 = vadd.f32 %v661, 0.00028619796
    %v663 = vmul.f32 %v660, %v662
    %v664 = vadd.f32 %v663, 0.0036580483
    %v665 = vmul.f32 %v660, %v664
    %v666 = vadd.f32 %v665, 0.05243302
    %v667 = vmul.f32 %v660, %v666
    %v668 = vadd.f32 %v667, 0.18741608
    %v669 = vmul.f32 %v660, %v668
    %v670 = vadd.f32 %v669, 1.1283791
    %v671 = vmul.f32 %v526, %v670
    %v672 = vmul.f32 %v660, 3.8918573e-05
    %v673 = vadd.f32 %v672, 0.001143296
    %v674 = vmul.f32 %v660, %v673
    %v675 = vadd.f32 %v674, 0.014752088
    %v676 = vmul.f32 %v660, %v675
    %v677 = vadd.f32 %v676, 0.112945676
    %v678 = vmul.f32 %v660, %v677
    %v679 = vadd.f32 %v678, 0.4994258
    %v680 = vmul.f32 %v660, %v679
    %v681 = vadd.f32 %v680, 1.0
    %v682 = vrcp.pop %v681
    %v683 = vmul.f32 %v681, %v682
    %v684 = vsub.f32 1.0, %v683
    %v685 = vmul.f32 %v682, %v684
    %v686 = vadd.f32 %v682, %v685
    %vm687 = vweird.f32 %v681
    %vm688 = vweird.f32 %v682
    %vm689 = vmor %vm687, %vm688
    %v690 = vsel %vm689, %v682, %v686
    %v691 = vand.u32 2147483647, %v681
    %vm692 = vcmp.eq.f32.partialorder %v691, 8.507059e+37
    %v693 = vand.u32 %v681, 2147483648
    %v694 = vor.u32 1.1754944e-38, %v693
    %v695 = vsel %vm692, %v694, %v690
    %v696 = vmul.f32 %v671, %v695
    %v697 = vmin.f32 %v696, 1.0
    %v698 = vmax.f32 %v697, -1.0
    %v699 = vmul.f32 %v527, %v527
    %v700 = vmin.f32 16.0, %v699
    %v701 = vmul.f32 %v700, 2.1237322e-06
    %v702 = vadd.f32 %v701, 0.00028619796
    %v703 = vmul.f32 %v700, %v702
    %v704 = vadd.f32 %v703, 0.0036580483
    %v705 = vmul.f32 %v700, %v704
    %v706 = vadd.f32 %v705, 0.05243302
    %v707 = vmul.f32 %v700, %v706
    %v708 = vadd.f32 %v707, 0.18741608
    %v709 = vmul.f32 %v700, %v708
    %v710 = vadd.f32 %v709, 1.1283791
    %v711 = vmul.f32 %v527, %v710
    %v712 = vmul.f32 %v700, 3.8918573e-05
    %v713 = vadd.f32 %v712, 0.001143296
    %v714 = vmul.f32 %v700, %v713
    %v715 = vadd.f32 %v714, 0.014752088
    %v716 = vmul.f32 %v700, %v715
    %v717 = vadd.f32 %v716, 0.112945676
    %v718 = vmul.f32 %v700, %v717
    %v719 = vadd.f32 %v718, 0.4994258
    %v720 = vmul.f32 %v700, %v719
    %v721 = vadd.f32 %v720, 1.0
    %v722 = vrcp.pop %v721
    %v723 = vmul.f32 %v721, %v722
    %v724 = vsub.f32 1.0, %v723
    %v725 = vmul.f32 %v722, %v724
    %v726 = vadd.f32 %v722, %v725
    %vm727 = vweird.f32 %v721
    %vm728 = vweird.f32 %v722
    %vm729 = vmor %vm727, %vm728
    %v730 = vsel %vm729, %v722, %v726
    %v731 = vand.u32 2147483647, %v721
    %vm732 = vcmp.eq.f32.partialorder %v731, 8.507059e+37
    %v733 = vand.u32 %v721, 2147483648
    %v734 = vor.u32 1.1754944e-38, %v733
    %v735 = vsel %vm732, %v734, %v730
    %v736 = vmul.f32 %v711, %v735
    %v737 = vmin.f32 %v736, 1.0
    %v738 = vmax.f32 %v737, -1.0
    %v739 = vmul.f32 %v528, %v528
    %v740 = vmin.f32 16.0, %v739
    %v741 = vmul.f32 %v740, 2.1237322e-06
    %v742 = vadd.f32 %v741, 0.00028619796
    %v743 = vmul.f32 %v740, %v742
    %v744 = vadd.f32 %v743, 0.0036580483
    %v745 = vmul.f32 %v740, %v744
    %v746 = vadd.f32 %v745, 0.05243302
    %v747 = vmul.f32 %v740, %v746
    %v748 = vadd.f32 %v747, 0.18741608
    %v749 = vmul.f32 %v740, %v748
    %v750 = vadd.f32 %v749, 1.1283791
    %v751 = vmul.f32 %v528, %v750
    %v752 = vmul.f32 %v740, 3.8918573e-05
    %v753 = vadd.f32 %v752, 0.001143296
    %v754 = vmul.f32 %v740, %v753
    %v755 = vadd.f32 %v754, 0.014752088
    %v756 = vmul.f32 %v740, %v755
    %v757 = vadd.f32 %v756, 0.112945676
    %v758 = vmul.f32 %v740, %v757
    %v759 = vadd.f32 %v758, 0.4994258
    %v760 = vmul.f32 %v740, %v759
    %v761 = vadd.f32 %v760, 1.0
    %v762 = vrcp.pop %v761
    %v763 = vmul.f32 %v761, %v762
    %v764 = vsub.f32 1.0, %v763
    %v765 = vmul.f32 %v762, %v764
    %v766 = vadd.f32 %v762, %v765
    %vm767 = vweird.f32 %v761
    %vm768 = vweird.f32 %v762
    %vm769 = vmor %vm767, %vm768
    %v770 = vsel %vm769, %v762, %v766
    %v771 = vand.u32 2147483647, %v761
    %vm772 = vcmp.eq.f32.partialorder %v771, 8.507059e+37
    %v773 = vand.u32 %v761, 2147483648
    %v774 = vor.u32 1.1754944e-38, %v773
    %v775 = vsel %vm772, %v774, %v770
    %v776 = vmul.f32 %v751, %v775
    %v777 = vmin.f32 %v776, 1.0
    %v778 = vmax.f32 %v777, -1.0
    %v779 = vmul.f32 %v529, %v529
    %v780 = vmin.f32 16.0, %v779
    %v781 = vmul.f32 %v780, 2.1237322e-06
    %v782 = vadd.f32 %v781, 0.00028619796
    %v783 = vmul.f32 %v780, %v782
    %v784 = vadd.f32 %v783, 0.0036580483
    %v785 = vmul.f32 %v780, %v784
    %v786 = vadd.f32 %v785, 0.05243302
    %v787 = vmul.f32 %v780, %v786
    %v788 = vadd.f32 %v787, 0.18741608
    %v789 = vmul.f32 %v780, %v788
    %v790 = vadd.f32 %v789, 1.1283791
    %v791 = vmul.f32 %v529, %v790
    %v792 = vmul.f32 %v780, 3.8918573e-05
    %v793 = vadd.f32 %v792, 0.001143296
    %v794 = vmul.f32 %v780, %v793
    %v795 = vadd.f32 %v794, 0.014752088
    %v796 = vmul.f32 %v780, %v795
    %v797 = vadd.f32 %v796, 0.112945676
    %v798 = vmul.f32 %v780, %v797
    %v799 = vadd.f32 %v798, 0.4994258
    %v800 = vmul.f32 %v780, %v799
    %v801 = vadd.f32 %v800, 1.0
    %v802 = vrcp.pop %v801
    %v803 = vmul.f32 %v801, %v802
    %v804 = vsub.f32 1.0, %v803
    %v805 = vmul.f32 %v802, %v804
    %v806 = vadd.f32 %v802, %v805
    %vm807 = vweird.f32 %v801
    %vm808 = vweird.f32 %v802
    %vm809 = vmor %vm807, %vm808
    %v810 = vsel %vm809, %v802, %v806
    %v811 = vand.u32 2147483647, %v801
    %vm812 = vcmp.eq.f32.partialorder %v811, 8.507059e+37
    %v813 = vand.u32 %v801, 2147483648
    %v814 = vor.u32 1.1754944e-38, %v813
    %v815 = vsel %vm812, %v814, %v810
    %v816 = vmul.f32 %v791, %v815
    %v817 = vmin.f32 %v816, 1.0
    %v818 = vmax.f32 %v817, -1.0
    %v819 = vmul.f32 %v530, %v530
    %v820 = vmin.f32 16.0, %v819
    %v821 = vmul.f32 %v820, 2.1237322e-06
    %v822 = vadd.f32 %v821, 0.00028619796
    %v823 = vmul.f32 %v820, %v822
    %v824 = vadd.f32 %v823, 0.0036580483
    %v825 = vmul.f32 %v820, %v824
    %v826 = vadd.f32 %v825, 0.05243302
    %v827 = vmul.f32 %v820, %v826
    %v828 = vadd.f32 %v827, 0.18741608
    %v829 = vmul.f32 %v820, %v828
    %v830 = vadd.f32 %v829, 1.1283791
    %v831 = vmul.f32 %v530, %v830
    %v832 = vmul.f32 %v820, 3.8918573e-05
    %v833 = vadd.f32 %v832, 0.001143296
    %v834 = vmul.f32 %v820, %v833
    %v835 = vadd.f32 %v834, 0.014752088
    %v836 = vmul.f32 %v820, %v835
    %v837 = vadd.f32 %v836, 0.112945676
    %v838 = vmul.f32 %v820, %v837
    %v839 = vadd.f32 %v838, 0.4994258
    %v840 = vmul.f32 %v820, %v839
    %v841 = vadd.f32 %v840, 1.0
    %v842 = vrcp.pop %v841
    %v843 = vmul.f32 %v841, %v842
    %v844 = vsub.f32 1.0, %v843
    %v845 = vmul.f32 %v842, %v844
    %v846 = vadd.f32 %v842, %v845
    %vm847 = vweird.f32 %v841
    %vm848 = vweird.f32 %v842
    %vm849 = vmor %vm847, %vm848
    %v850 = vsel %vm849, %v842, %v846
    %v851 = vand.u32 2147483647, %v841
    %vm852 = vcmp.eq.f32.partialorder %v851, 8.507059e+37
    %v853 = vand.u32 %v841, 2147483648
    %v854 = vor.u32 1.1754944e-38, %v853
    %v855 = vsel %vm852, %v854, %v850
    %v856 = vmul.f32 %v831, %v855
    %v857 = vmin.f32 %v856, 1.0
    %v858 = vmax.f32 %v857, -1.0
    %v859 = vmul.f32 %v531, %v531
    %v860 = vmin.f32 16.0, %v859
    %v861 = vmul.f32 %v860, 2.1237322e-06
    %v862 = vadd.f32 %v861, 0.00028619796
    %v863 = vmul.f32 %v860, %v862
    %v864 = vadd.f32 %v863, 0.0036580483
    %v865 = vmul.f32 %v860, %v864
    %v866 = vadd.f32 %v865, 0.05243302
    %v867 = vmul.f32 %v860, %v866
    %v868 = vadd.f32 %v867, 0.18741608
    %v869 = vmul.f32 %v860, %v868
    %v870 = vadd.f32 %v869, 1.1283791
    %v871 = vmul.f32 %v531, %v870
    %v872 = vmul.f32 %v860, 3.8918573e-05
    %v873 = vadd.f32 %v872, 0.001143296
    %v874 = vmul.f32 %v860, %v873
    %v875 = vadd.f32 %v874, 0.014752088
    %v876 = vmul.f32 %v860, %v875
    %v877 = vadd.f32 %v876, 0.112945676
    %v878 = vmul.f32 %v860, %v877
    %v879 = vadd.f32 %v878, 0.4994258
    %v880 = vmul.f32 %v860, %v879
    %v881 = vadd.f32 %v880, 1.0
    %v882 = vrcp.pop %v881
    %v883 = vmul.f32 %v881, %v882
    %v884 = vsub.f32 1.0, %v883
    %v885 = vmul.f32 %v882, %v884
    %v886 = vadd.f32 %v882, %v885
    %vm887 = vweird.f32 %v881
    %vm888 = vweird.f32 %v882
    %vm889 = vmor %vm887, %vm888
    %v890 = vsel %vm889, %v882, %v886
    %v891 = vand.u32 2147483647, %v881
    %vm892 = vcmp.eq.f32.partialorder %v891, 8.507059e+37
    %v893 = vand.u32 %v881, 2147483648
    %v894 = vor.u32 1.1754944e-38, %v893
    %v895 = vsel %vm892, %v894, %v890
    %v896 = vmul.f32 %v871, %v895
    %v897 = vmin.f32 %v896, 1.0
    %v898 = vmax.f32 %v897, -1.0
    %v899 = vmul.f32 %v532, %v532
    %v900 = vmin.f32 16.0, %v899
    %v901 = vmul.f32 %v900, 2.1237322e-06
    %v902 = vadd.f32 %v901, 0.00028619796
    %v903 = vmul.f32 %v900, %v902
    %v904 = vadd.f32 %v903, 0.0036580483
    %v905 = vmul.f32 %v900, %v904
    %v906 = vadd.f32 %v905, 0.05243302
    %v907 = vmul.f32 %v900, %v906
    %v908 = vadd.f32 %v907, 0.18741608
    %v909 = vmul.f32 %v900, %v908
    %v910 = vadd.f32 %v909, 1.1283791
    %v911 = vmul.f32 %v532, %v910
    %v912 = vmul.f32 %v900, 3.8918573e-05
    %v913 = vadd.f32 %v912, 0.001143296
    %v914 = vmul.f32 %v900, %v913
    %v915 = vadd.f32 %v914, 0.014752088
    %v916 = vmul.f32 %v900, %v915
    %v917 = vadd.f32 %v916, 0.112945676
    %v918 = vmul.f32 %v900, %v917
    %v919 = vadd.f32 %v918, 0.4994258
    %v920 = vmul.f32 %v900, %v919
    %v921 = vadd.f32 %v920, 1.0
    %v922 = vrcp.pop %v921
    %v923 = vmul.f32 %v921, %v922
    %v924 = vsub.f32 1.0, %v923
    %v925 = vmul.f32 %v922, %v924
    %v926 = vadd.f32 %v922, %v925
    %vm927 = vweird.f32 %v921
    %vm928 = vweird.f32 %v922
    %vm929 = vmor %vm927, %vm928
    %v930 = vsel %vm929, %v922, %v926
    %v931 = vand.u32 2147483647, %v921
    %vm932 = vcmp.eq.f32.partialorder %v931, 8.507059e+37
    %v933 = vand.u32 %v921, 2147483648
    %v934 = vor.u32 1.1754944e-38, %v933
    %v935 = vsel %vm932, %v934, %v930
    %v936 = vmul.f32 %v911, %v935
    %v937 = vmin.f32 %v936, 1.0
    %v938 = vmax.f32 %v937, -1.0
    %v939 = vmul.f32 %v533, %v533
    %v940 = vmin.f32 16.0, %v939
    %v941 = vmul.f32 %v940, 2.1237322e-06
    %v942 = vadd.f32 %v941, 0.00028619796
    %v943 = vmul.f32 %v940, %v942
    %v944 = vadd.f32 %v943, 0.0036580483
    %v945 = vmul.f32 %v940, %v944
    %v946 = vadd.f32 %v945, 0.05243302
    %v947 = vmul.f32 %v940, %v946
    %v948 = vadd.f32 %v947, 0.18741608
    %v949 = vmul.f32 %v940, %v948
    %v950 = vadd.f32 %v949, 1.1283791
    %v951 = vmul.f32 %v533, %v950
    %v952 = vmul.f32 %v940, 3.8918573e-05
    %v953 = vadd.f32 %v952, 0.001143296
    %v954 = vmul.f32 %v940, %v953
    %v955 = vadd.f32 %v954, 0.014752088
    %v956 = vmul.f32 %v940, %v955
    %v957 = vadd.f32 %v956, 0.112945676
    %v958 = vmul.f32 %v940, %v957
    %v959 = vadd.f32 %v958, 0.4994258
    %v960 = vmul.f32 %v940, %v959
    %v961 = vadd.f32 %v960, 1.0
    %v962 = vrcp.pop %v961
    %v963 = vmul.f32 %v961, %v962
    %v964 = vsub.f32 1.0, %v963
    %v965 = vmul.f32 %v962, %v964
    %v966 = vadd.f32 %v962, %v965
    %vm967 = vweird.f32 %v961
    %vm968 = vweird.f32 %v962
    %vm969 = vmor %vm967, %vm968
    %v970 = vsel %vm969, %v962, %v966
    %v971 = vand.u32 2147483647, %v961
    %vm972 = vcmp.eq.f32.partialorder %v971, 8.507059e+37
    %v973 = vand.u32 %v961, 2147483648
    %v974 = vor.u32 1.1754944e-38, %v973
    %v975 = vsel %vm972, %v974, %v970
    %v976 = vmul.f32 %v951, %v975
    %v977 = vmin.f32 %v976, 1.0
    %v978 = vmax.f32 %v977, -1.0
    %v979 = vmul.f32 %v534, %v534
    %v980 = vmin.f32 16.0, %v979
    %v981 = vmul.f32 %v980, 2.1237322e-06
    %v982 = vadd.f32 %v981, 0.00028619796
    %v983 = vmul.f32 %v980, %v982
    %v984 = vadd.f32 %v983, 0.0036580483
    %v985 = vmul.f32 %v980, %v984
    %v986 = vadd.f32 %v985, 0.05243302
    %v987 = vmul.f32 %v980, %v986
    %v988 = vadd.f32 %v987, 0.18741608
    %v989 = vmul.f32 %v980, %v988
    %v990 = vadd.f32 %v989, 1.1283791
    %v991 = vmul.f32 %v534, %v990
    %v992 = vmul.f32 %v980, 3.8918573e-05
    %v993 = vadd.f32 %v992, 0.001143296
    %v994 = vmul.f32 %v980, %v993
    %v995 = vadd.f32 %v994, 0.014752088
    %v996 = vmul.f32 %v980, %v995
    %v997 = vadd.f32 %v996, 0.112945676
    %v998 = vmul.f32 %v980, %v997
    %v999 = vadd.f32 %v998, 0.4994258
    %v1000 = vmul.f32 %v980, %v999
    %v1001 = vadd.f32 %v1000, 1.0
    %v1002 = vrcp.pop %v1001
    %v1003 = vmul.f32 %v1001, %v1002
    %v1004 = vsub.f32 1.0, %v1003
    %v1005 = vmul.f32 %v1002, %v1004
    %v1006 = vadd.f32 %v1002, %v1005
    %vm1007 = vweird.f32 %v1001
    %vm1008 = vweird.f32 %v1002
    %vm1009 = vmor %vm1007, %vm1008
    %v1010 = vsel %vm1009, %v1002, %v1006
    %v1011 = vand.u32 2147483647, %v1001
    %vm1012 = vcmp.eq.f32.partialorder %v1011, 8.507059e+37
    %v1013 = vand.u32 %v1001, 2147483648
    %v1014 = vor.u32 1.1754944e-38, %v1013
    %v1015 = vsel %vm1012, %v1014, %v1010
    %v1016 = vmul.f32 %v991, %v1015
    %v1017 = vmin.f32 %v1016, 1.0
    %v1018 = vmax.f32 %v1017, -1.0
    %v1019 = vmul.f32 %v535, %v535
    %v1020 = vmin.f32 16.0, %v1019
    %v1021 = vmul.f32 %v1020, 2.1237322e-06
    %v1022 = vadd.f32 %v1021, 0.00028619796
    %v1023 = vmul.f32 %v1020, %v1022
    %v1024 = vadd.f32 %v1023, 0.0036580483
    %v1025 = vmul.f32 %v1020, %v1024
    %v1026 = vadd.f32 %v1025, 0.05243302
    %v1027 = vmul.f32 %v1020, %v1026
    %v1028 = vadd.f32 %v1027, 0.18741608
    %v1029 = vmul.f32 %v1020, %v1028
    %v1030 = vadd.f32 %v1029, 1.1283791
    %v1031 = vmul.f32 %v535, %v1030
    %v1032 = vmul.f32 %v1020, 3.8918573e-05
    %v1033 = vadd.f32 %v1032, 0.001143296
    %v1034 = vmul.f32 %v1020, %v1033
    %v1035 = vadd.f32 %v1034, 0.014752088
    %v1036 = vmul.f32 %v1020, %v1035
    %v1037 = vadd.f32 %v1036, 0.112945676
    %v1038 = vmul.f32 %v1020, %v1037
    %v1039 = vadd.f32 %v1038, 0.4994258
    %v1040 = vmul.f32 %v1020, %v1039
    %v1041 = vadd.f32 %v1040, 1.0
    %v1042 = vrcp.pop %v1041
    %v1043 = vmul.f32 %v1041, %v1042
    %v1044 = vsub.f32 1.0, %v1043
    %v1045 = vmul.f32 %v1042, %v1044
    %v1046 = vadd.f32 %v1042, %v1045
    %vm1047 = vweird.f32 %v1041
    %vm1048 = vweird.f32 %v1042
    %vm1049 = vmor %vm1047, %vm1048
    %v1050 = vsel %vm1049, %v1042, %v1046
    %v1051 = vand.u32 2147483647, %v1041
    %vm1052 = vcmp.eq.f32.partialorder %v1051, 8.507059e+37
    %v1053 = vand.u32 %v1041, 2147483648
    %v1054 = vor.u32 1.1754944e-38, %v1053
    %v1055 = vsel %vm1052, %v1054, %v1050
    %v1056 = vmul.f32 %v1031, %v1055
    %v1057 = vmin.f32 %v1056, 1.0
    %v1058 = vmax.f32 %v1057, -1.0
    %v1059 = vmul.f32 %v536, %v536
    %v1060 = vmin.f32 16.0, %v1059
    %v1061 = vmul.f32 %v1060, 2.1237322e-06
    %v1062 = vadd.f32 %v1061, 0.00028619796
    %v1063 = vmul.f32 %v1060, %v1062
    %v1064 = vadd.f32 %v1063, 0.0036580483
    %v1065 = vmul.f32 %v1060, %v1064
    %v1066 = vadd.f32 %v1065, 0.05243302
    %v1067 = vmul.f32 %v1060, %v1066
    %v1068 = vadd.f32 %v1067, 0.18741608
    %v1069 = vmul.f32 %v1060, %v1068
    %v1070 = vadd.f32 %v1069, 1.1283791
    %v1071 = vmul.f32 %v536, %v1070
    %v1072 = vmul.f32 %v1060, 3.8918573e-05
    %v1073 = vadd.f32 %v1072, 0.001143296
    %v1074 = vmul.f32 %v1060, %v1073
    %v1075 = vadd.f32 %v1074, 0.014752088
    %v1076 = vmul.f32 %v1060, %v1075
    %v1077 = vadd.f32 %v1076, 0.112945676
    %v1078 = vmul.f32 %v1060, %v1077
    %v1079 = vadd.f32 %v1078, 0.4994258
    %v1080 = vmul.f32 %v1060, %v1079
    %v1081 = vadd.f32 %v1080, 1.0
    %v1082 = vrcp.pop %v1081
    %v1083 = vmul.f32 %v1081, %v1082
    %v1084 = vsub.f32 1.0, %v1083
    %v1085 = vmul.f32 %v1082, %v1084
    %v1086 = vadd.f32 %v1082, %v1085
    %vm1087 = vweird.f32 %v1081
    %vm1088 = vweird.f32 %v1082
    %vm1089 = vmor %vm1087, %vm1088
    %v1090 = vsel %vm1089, %v1082, %v1086
    %v1091 = vand.u32 2147483647, %v1081
    %vm1092 = vcmp.eq.f32.partialorder %v1091, 8.507059e+37
    %v1093 = vand.u32 %v1081, 2147483648
    %v1094 = vor.u32 1.1754944e-38, %v1093
    %v1095 = vsel %vm1092, %v1094, %v1090
    %v1096 = vmul.f32 %v1071, %v1095
    %v1097 = vmin.f32 %v1096, 1.0
    %v1098 = vmax.f32 %v1097, -1.0
    %v1099 = vmul.f32 %v537, %v537
    %v1100 = vmin.f32 16.0, %v1099
    %v1101 = vmul.f32 %v1100, 2.1237322e-06
    %v1102 = vadd.f32 %v1101, 0.00028619796
    %v1103 = vmul.f32 %v1100, %v1102
    %v1104 = vadd.f32 %v1103, 0.0036580483
    %v1105 = vmul.f32 %v1100, %v1104
    %v1106 = vadd.f32 %v1105, 0.05243302
    %v1107 = vmul.f32 %v1100, %v1106
    %v1108 = vadd.f32 %v1107, 0.18741608
    %v1109 = vmul.f32 %v1100, %v1108
    %v1110 = vadd.f32 %v1109, 1.1283791
    %v1111 = vmul.f32 %v537, %v1110
    %v1112 = vmul.f32 %v1100, 3.8918573e-05
    %v1113 = vadd.f32 %v1112, 0.001143296
    %v1114 = vmul.f32 %v1100, %v1113
    %v1115 = vadd.f32 %v1114, 0.014752088
    %v1116 = vmul.f32 %v1100, %v1115
    %v1117 = vadd.f32 %v1116, 0.112945676
    %v1118 = vmul.f32 %v1100, %v1117
    %v1119 = vadd.f32 %v1118, 0.4994258
    %v1120 = vmul.f32 %v1100, %v1119
    %v1121 = vadd.f32 %v1120, 1.0
    %v1122 = vrcp.pop %v1121
    %v1123 = vmul.f32 %v1121, %v1122
    %v1124 = vsub.f32 1.0, %v1123
    %v1125 = vmul.f32 %v1122, %v1124
    %v1126 = vadd.f32 %v1122, %v1125
    %vm1127 = vweird.f32 %v1121
    %vm1128 = vweird.f32 %v1122
    %vm1129 = vmor %vm1127, %vm1128
    %v1130 = vsel %vm1129, %v1122, %v1126
    %v1131 = vand.u32 2147483647, %v1121
    %vm1132 = vcmp.eq.f32.partialorder %v1131, 8.507059e+37
    %v1133 = vand.u32 %v1121, 2147483648
    %v1134 = vor.u32 1.1754944e-38, %v1133
    %v1135 = vsel %vm1132, %v1134, %v1130
    %v1136 = vmul.f32 %v1111, %v1135
    %v1137 = vmin.f32 %v1136, 1.0
    %v1138 = vmax.f32 %v1137, -1.0
    %v1139 = vmul.f32 %v538, %v538
    %v1140 = vmin.f32 16.0, %v1139
    %v1141 = vmul.f32 %v1140, 2.1237322e-06
    %v1142 = vadd.f32 %v1141, 0.00028619796
    %v1143 = vmul.f32 %v1140, %v1142
    %v1144 = vadd.f32 %v1143, 0.0036580483
    %v1145 = vmul.f32 %v1140, %v1144
    %v1146 = vadd.f32 %v1145, 0.05243302
    %v1147 = vmul.f32 %v1140, %v1146
    %v1148 = vadd.f32 %v1147, 0.18741608
    %v1149 = vmul.f32 %v1140, %v1148
    %v1150 = vadd.f32 %v1149, 1.1283791
    %v1151 = vmul.f32 %v538, %v1150
    %v1152 = vmul.f32 %v1140, 3.8918573e-05
    %v1153 = vadd.f32 %v1152, 0.001143296
    %v1154 = vmul.f32 %v1140, %v1153
    %v1155 = vadd.f32 %v1154, 0.014752088
    %v1156 = vmul.f32 %v1140, %v1155
    %v1157 = vadd.f32 %v1156, 0.112945676
    %v1158 = vmul.f32 %v1140, %v1157
    %v1159 = vadd.f32 %v1158, 0.4994258
    %v1160 = vmul.f32 %v1140, %v1159
    %v1161 = vadd.f32 %v1160, 1.0
    %v1162 = vrcp.pop %v1161
    %v1163 = vmul.f32 %v1161, %v1162
    %v1164 = vsub.f32 1.0, %v1163
    %v1165 = vmul.f32 %v1162, %v1164
    %v1166 = vadd.f32 %v1162, %v1165
    %vm1167 = vweird.f32 %v1161
    %vm1168 = vweird.f32 %v1162
    %vm1169 = vmor %vm1167, %vm1168
    %v1170 = vsel %vm1169, %v1162, %v1166
    %v1171 = vand.u32 2147483647, %v1161
    %vm1172 = vcmp.eq.f32.partialorder %v1171, 8.507059e+37
    %v1173 = vand.u32 %v1161, 2147483648
    %v1174 = vor.u32 1.1754944e-38, %v1173
    %v1175 = vsel %vm1172, %v1174, %v1170
    %v1176 = vmul.f32 %v1151, %v1175
    %v1177 = vmin.f32 %v1176, 1.0
    %v1178 = vmax.f32 %v1177, -1.0
    %v1179 = vadd.f32 %v578, 1.0
    %v1180 = vadd.f32 %v618, 1.0
    %v1181 = vadd.f32 %v658, 1.0
    %v1182 = vadd.f32 %v698, 1.0
    %v1183 = vadd.f32 %v738, 1.0
    %v1184 = vadd.f32 %v778, 1.0
    %v1185 = vadd.f32 %v818, 1.0
    %v1186 = vadd.f32 %v858, 1.0
    %v1187 = vadd.f32 %v898, 1.0
    %v1188 = vadd.f32 %v938, 1.0
    %v1189 = vadd.f32 %v978, 1.0
    %v1190 = vadd.f32 %v1018, 1.0
    %v1191 = vadd.f32 %v1058, 1.0
    %v1192 = vadd.f32 %v1098, 1.0
    %v1193 = vadd.f32 %v1138, 1.0
    %v1194 = vadd.f32 %v1178, 1.0
    %v1195 = vmul.f32 %v507, %v1179
    %v1196 = vmul.f32 %v508, %v1180
    %v1197 = vmul.f32 %v509, %v1181
    %v1198 = vmul.f32 %v510, %v1182
    %v1199 = vmul.f32 %v511, %v1183
    %v1200 = vmul.f32 %v512, %v1184
    %v1201 = vmul.f32 %v513, %v1185
    %v1202 = vmul.f32 %v514, %v1186
    %v1203 = vmul.f32 %v515, %v1187
    %v1204 = vmul.f32 %v516, %v1188
    %v1205 = vmul.f32 %v517, %v1189
    %v1206 = vmul.f32 %v518, %v1190
    %v1207 = vmul.f32 %v519, %v1191
    %v1208 = vmul.f32 %v520, %v1192
    %v1209 = vmul.f32 %v521, %v1193
    %v1210 = vmul.f32 %v522, %v1194
    %v1211 = vld [vmem:[%s3] sm:$0xff]
    %v1212 = vld [vmem:[%s3 + $0x8] sm:$0xff]
    %v1213 = vld [vmem:[%s3 + $0x10] sm:$0xff]
    %v1214 = vld [vmem:[%s3 + $0x18] sm:$0xff]
    %v1215 = vld [vmem:[%s3 + $0x20] sm:$0xff]
    %v1216 = vld [vmem:[%s3 + $0x28] sm:$0xff]
    %v1217 = vld [vmem:[%s3 + $0x30] sm:$0xff]
    %v1218 = vld [vmem:[%s3 + $0x38] sm:$0xff]
    %v1219 = vld [vmem:[%s3 + $0x40] sm:$0xff]
    %v1220 = vld [vmem:[%s3 + $0x48] sm:$0xff]
    %v1221 = vld [vmem:[%s3 + $0x50] sm:$0xff]
    %v1222 = vld [vmem:[%s3 + $0x58] sm:$0xff]
    %v1223 = vld [vmem:[%s3 + $0x60] sm:$0xff]
    %v1224 = vld [vmem:[%s3 + $0x68] sm:$0xff]
    %v1225 = vld [vmem:[%s3 + $0x70] sm:$0xff]
    %v1226 = vld [vmem:[%s3 + $0x78] sm:$0xff]
    %v1227 = vld [vmem:[#allocation2] sm:$0x1]
    %v1229 = vperm.slane %v1227, 0
    %1231 = vmatpush.msra.mxu0 %v1226
    %1232 = vmatpush.msra.mxu0 %v1225
    %1233 = vmatpush.msra.mxu0 %v1224
    %1234 = vmatpush.msra.mxu0 %v1223
    %1235 = vmatpush.msra.mxu0 %v1222
    %1236 = vmatpush.msra.mxu0 %v1221
    %1237 = vmatpush.msra.mxu0 %v1220
    %1238 = vmatpush.msra.mxu0 %v1219
    %1239 = vmatpush.msra.mxu0 %v1218
    %1240 = vmatpush.msra.mxu0 %v1217
    %1241 = vmatpush.msra.mxu0 %v1216
    %1242 = vmatpush.msra.mxu0 %v1215
    %1243 = vmatpush.msra.mxu0 %v1214
    %1244 = vmatpush.msra.mxu0 %v1213
    %1245 = vmatpush.msra.mxu0 %v1212
    %1246 = vmatpush.msra.mxu0 %v1211
    %1247 = vmatmul.f32.gmra.mxu0 %v1195
    %v1248 = vpop.f32.mrf.mxu0
    %v1249 = vadd.f32 %v1229, %v1248
    %1250 = vmatmul.f32.gmra.mxu0 %v1196
    %v1251 = vpop.f32.mrf.mxu0
    %v1252 = vadd.f32 %v1229, %v1251
    %1253 = vmatmul.f32.gmra.mxu0 %v1197
    %v1254 = vpop.f32.mrf.mxu0
    %v1255 = vadd.f32 %v1229, %v1254
    %1256 = vmatmul.f32.gmra.mxu0 %v1198
    %v1257 = vpop.f32.mrf.mxu0
    %v1258 = vadd.f32 %v1229, %v1257
    %1259 = vmatmul.f32.gmra.mxu0 %v1199
    %v1260 = vpop.f32.mrf.mxu0
    %v1261 = vadd.f32 %v1229, %v1260
    %1262 = vmatmul.f32.gmra.mxu0 %v1200
    %v1263 = vpop.f32.mrf.mxu0
    %v1264 = vadd.f32 %v1229, %v1263
    %1265 = vmatmul.f32.gmra.mxu0 %v1201
    %v1266 = vpop.f32.mrf.mxu0
    %v1267 = vadd.f32 %v1229, %v1266
    %1268 = vmatmul.f32.gmra.mxu0 %v1202
    %v1269 = vpop.f32.mrf.mxu0
    %v1270 = vadd.f32 %v1229, %v1269
    %1271 = vmatmul.f32.gmra.mxu0 %v1203
    %v1272 = vpop.f32.mrf.mxu0
    %v1273 = vadd.f32 %v1229, %v1272
    %1274 = vmatmul.f32.gmra.mxu0 %v1204
    %v1275 = vpop.f32.mrf.mxu0
    %v1276 = vadd.f32 %v1229, %v1275
    %1277 = vmatmul.f32.gmra.mxu0 %v1205
    %v1278 = vpop.f32.mrf.mxu0
    %v1279 = vadd.f32 %v1229, %v1278
    %1280 = vmatmul.f32.gmra.mxu0 %v1206
    %v1281 = vpop.f32.mrf.mxu0
    %v1282 = vadd.f32 %v1229, %v1281
    %1283 = vmatmul.f32.gmra.mxu0 %v1207
    %v1284 = vpop.f32.mrf.mxu0
    %v1285 = vadd.f32 %v1229, %v1284
    %1286 = vmatmul.f32.gmra.mxu0 %v1208
    %v1287 = vpop.f32.mrf.mxu0
    %v1288 = vadd.f32 %v1229, %v1287
    %1289 = vmatmul.f32.gmra.mxu0 %v1209
    %v1290 = vpop.f32.mrf.mxu0
    %v1291 = vadd.f32 %v1229, %v1290
    %1292 = vmatmul.f32.gmra.mxu0 %v1210
    %v1293 = vpop.f32.mrf.mxu0
    %v1294 = vadd.f32 %v1229, %v1293
    %1295 = vdwg.mxu0
    %vm1296 = vcmask 7168
    %1297 = vst.msk [vmem:[%s5] sm:$0xff] %vm1296, %v1249
    %1298 = vst.msk [vmem:[%s5 + $0x8] sm:$0xff] %vm1296, %v1252
    %1299 = vst.msk [vmem:[%s5 + $0x10] sm:$0xff] %vm1296, %v1255
    %1300 = vst.msk [vmem:[%s5 + $0x18] sm:$0xff] %vm1296, %v1258
    %1301 = vst.msk [vmem:[%s5 + $0x20] sm:$0xff] %vm1296, %v1261
    %1302 = vst.msk [vmem:[%s5 + $0x28] sm:$0xff] %vm1296, %v1264
    %1303 = vst.msk [vmem:[%s5 + $0x30] sm:$0xff] %vm1296, %v1267
    %1304 = vst.msk [vmem:[%s5 + $0x38] sm:$0xff] %vm1296, %v1270
    %1305 = vst.msk [vmem:[%s5 + $0x40] sm:$0xff] %vm1296, %v1273
    %1306 = vst.msk [vmem:[%s5 + $0x48] sm:$0xff] %vm1296, %v1276
    %1307 = vst.msk [vmem:[%s5 + $0x50] sm:$0xff] %vm1296, %v1279
    %1308 = vst.msk [vmem:[%s5 + $0x58] sm:$0xff] %vm1296, %v1282
    %1309 = vst.msk [vmem:[%s5 + $0x60] sm:$0xff] %vm1296, %v1285
    %1310 = vst.msk [vmem:[%s5 + $0x68] sm:$0xff] %vm1296, %v1288
    %1311 = vst.msk [vmem:[%s5 + $0x70] sm:$0xff] %vm1296, %v1291
    %1312 = vst.msk [vmem:[%s5 + $0x78] sm:$0xff] %vm1296, %v1294
    // Predicated region
    $region26: #{tpu_custom_call.1} parent=1 // pred_check
      _
    $region27: #{tpu_custom_call.1} parent=1 // pred_check_branch
      %1314 = sbr.rel (0) target = $region29
    $region28: #{tpu_custom_call.1} parent=1 // pred_region
      _
    $region29: #{tpu_custom_call.1} parent=1 // pred_fallthru
      _
    // Predicated region
    $region30: #{tpu_custom_call.1} parent=1 // pred_check
      _
    $region31: #{tpu_custom_call.1} parent=1 // pred_check_branch
      %1316 = sbr.rel (0) target = $region33
    $region32: #{tpu_custom_call.1} parent=1 // pred_region
      _
    $region33: #{tpu_custom_call.1} parent=1 // pred_fallthru
      _
    %1317 = vsyncpa [#allocation4], 1

</llo_original>
